<compile_context>
chip_gen: v5e
topology: v5e:2x2
jax: 0.10.0
libtpu: 0.0.40
codegen_flags: <defaults>
</compile_context>

<pallas_src>
import math
import functools

import jax
import jax.numpy as jnp
from jax.experimental import pallas as pl
from jax.experimental.pallas import tpu as pltpu


# ----------------------------- model constants -----------------------------

VOCAB = 64
HIDDEN = 32
NUM_HEADS = 2
HEAD_DIM = HIDDEN // NUM_HEADS
FFN = 64
MAX_SEQ = 16
NUM_SEGMENTS = 2

# ------- weight-slab row layout (all rows lane-padded to 128, f32) ---------
_TOK_OFF = 0                      # (VOCAB,   H)  rows   0..63
_POS_OFF = 64                     # (MAX_SEQ, H)  rows  64..79
_SEG_OFF = 80                     # (NUM_SEG, H)  rows  80..81
_WQKV_OFF = 88                    # (H, 3H)       rows  88..119
_WO_OFF = 120                     # (H, H)        rows 120..151
_W1_OFF = 152                     # (H, FFN)      rows 152..183
_W2_OFF = 184                     # (FFN, H)      rows 184..247
_WP_OFF = 248                     # (H, H)        rows 248..279
_WSLAB_ROWS = 280

# ------- small-param-slab row layout (one row per vector, 128 lanes) -------
_LN_EMB_G, _LN_EMB_B = 0, 1
_LN1_G, _LN1_B = 2, 3
_LN2_G, _LN2_B = 4, 5
_BQKV, _BO, _B1, _B2, _BP, _WC, _BC = 6, 7, 8, 9, 10, 11, 12
_PSLAB_ROWS = 16


# ----------------------------- in-kernel helpers ----------------------------

def _gelu_tanh(x):
    # TODO(synk): PyTorch nn.GELU default is the exact erf form; tanh approximation kept
    # here (erf lowering availability in Mosaic is uncertain).
    c = math.sqrt(2.0 / math.pi)
    return 0.5 * x * (1.0 + jnp.tanh(c * (x + 0.044715 * x * x * x)))


def _layer_norm(x, gamma, beta, eps=1e-12):
    mu = jnp.mean(x, axis=-1, keepdims=True)
    var = jnp.mean((x - mu) * (x - mu), axis=-1, keepdims=True)
    return (x - mu) * jax.lax.rsqrt(var + eps) * gamma + beta


def _mm_bf16(a, b):
    # bf16 MXU operands, f32 accumulation (v5e/v6e/v7x MXUs are bf16-native).
    return jnp.dot(a.astype(jnp.bfloat16), b.astype(jnp.bfloat16),
                   preferred_element_type=jnp.float32)


# ----------------------------- fused Pallas kernel ---------------------------

def _fused_encoder_kernel(ids_ref, mask_ref, pslab_ref, wslab_ref, o_ref, ctx_ref,
                          *, batch, seq, num_heads, head_dim):
    f32 = jnp.float32
    H = num_heads * head_dim
    BS = batch * seq
    scale = 1.0 / math.sqrt(head_dim)

    def prow(row, width):            # (1, width) parameter row from the small slab
        return pslab_ref[row:row + 1, 0:width]

    # ---- embeddings: exact gathers as one-hot matmuls / blend (f32) ----
    ids = ids_ref[...]                                                       # (BS, 3) i32
    tok_oh = (ids[:, 0:1] ==
              jax.lax.broadcasted_iota(jnp.int32, (BS, VOCAB), 1)).astype(f32)
    pos_oh = (ids[:, 2:3] ==
              jax.lax.broadcasted_iota(jnp.int32, (BS, MAX_SEQ), 1)).astype(f32)
    seg_f = ids[:, 1:2].astype(f32)                                          # (BS, 1)

    tok_tbl = wslab_ref[_TOK_OFF:_TOK_OFF + VOCAB, 0:H]
    pos_tbl = wslab_ref[_POS_OFF:_POS_OFF + MAX_SEQ, 0:H]
    seg_tbl = wslab_ref[_SEG_OFF:_SEG_OFF + NUM_SEGMENTS, 0:H]
    x_emb = (jnp.dot(tok_oh, tok_tbl, preferred_element_type=f32)
             + jnp.dot(pos_oh, pos_tbl, preferred_element_type=f32)
             + (1.0 - seg_f) * seg_tbl[0:1, :] + seg_f * seg_tbl[1:2, :])

    # ---- embedding LayerNorm (f32) ----
    x = _layer_norm(x_emb, prow(_LN_EMB_G, H), prow(_LN_EMB_B, H))           # (BS, H)

    # ---- fused QKV projection (one bf16 MXU matmul) ----
    qkv = _mm_bf16(x, wslab_ref[_WQKV_OFF:_WQKV_OFF + H, 0:3 * H]) + prow(_BQKV, 3 * H)
    qkv3 = qkv.reshape(batch, seq, 3 * H)                                    # (B, S, 3H)

    # ---- attention: batched einsum over B, static loop over heads (f32) ----
    add_mask = ((1.0 - mask_ref[...]) * -10000.0)[:, None, :]                # (B, 1, S)
    for h in range(num_heads):
        lo = h * head_dim
        q_h = qkv3[:, :, lo:lo + head_dim]
        k_h = qkv3[:, :, H + lo:H + lo + head_dim]
        v_h = qkv3[:, :, 2 * H + lo:2 * H + lo + head_dim]
        s = jnp.einsum('bqd,bkd->bqk', q_h, k_h,
                       preferred_element_type=f32) * scale + add_mask        # (B, S, S)
        s = s - jnp.max(s, axis=-1, keepdims=True)
        p = jnp.exp(s)
        p = p / jnp.sum(p, axis=-1, keepdims=True)        # exact softmax (no approx recip)
        ctx_ref[:, :, lo:lo + head_dim] = jnp.einsum('bqk,bkd->bqd', p, v_h,
                                                     preferred_element_type=f32)
    ctx = ctx_ref[...].reshape(BS, H)

    # ---- attention output projection + residual + LN1 ----
    attn = _mm_bf16(ctx, wslab_ref[_WO_OFF:_WO_OFF + H, 0:H]) + prow(_BO, H)
    h1 = _layer_norm(x + attn, prow(_LN1_G, H), prow(_LN1_B, H))

    # ---- feed-forward (GELU) + residual + LN2 ----
    ff = _gelu_tanh(_mm_bf16(h1, wslab_ref[_W1_OFF:_W1_OFF + H, 0:FFN]) + prow(_B1, FFN))
    ff = _mm_bf16(ff, wslab_ref[_W2_OFF:_W2_OFF + FFN, 0:H]) + prow(_B2, H)
    h2 = _layer_norm(h1 + ff, prow(_LN2_G, H), prow(_LN2_B, H))              # (BS, H)

    # ---- pooler: CLS rows 0, S, 2S, ... selected via one-hot matmul (no concats) ----
    row_sel = (jax.lax.broadcasted_iota(jnp.int32, (batch, BS), 1)
               == seq * jax.lax.broadcasted_iota(jnp.int32, (batch, BS), 0)).astype(f32)
    cls = jnp.dot(row_sel, h2, preferred_element_type=f32)                   # (B, H)
    pooled = jnp.tanh(_mm_bf16(cls, wslab_ref[_WP_OFF:_WP_OFF + H, 0:H]) + prow(_BP, H))

    # Replaced classification layer Linear(H, 1): VPU row reduction, not an N=1 MXU matmul.
    logits = jnp.sum(pooled * prow(_WC, H), axis=-1, keepdims=True) + prow(_BC, 1)
    # TODO(synk): (B,1) output is a masked partial store; emit lane-dense if B is scaled up.
    o_ref[...] = logits.astype(o_ref.dtype)


def _full_spec(shape):
    nd = len(shape)
    return pl.BlockSpec(shape, lambda i, _nd=nd: (0,) * _nd)


# ------------------------- one-time parameter packing -------------------------

def pack_params(params):
    H = HIDDEN
    wslab = jnp.zeros((_WSLAB_ROWS, 128), jnp.float32)
    wslab = wslab.at[_TOK_OFF:_TOK_OFF + VOCAB, :H].set(params["tok_emb"])
    wslab = wslab.at[_POS_OFF:_POS_OFF + MAX_SEQ, :H].set(params["pos_emb"])
    wslab = wslab.at[_SEG_OFF:_SEG_OFF + NUM_SEGMENTS, :H].set(params["seg_emb"])
    wqkv = jnp.concatenate([params["Wq"], params["Wk"], params["Wv"]], axis=1)  # (H, 3H)
    wslab = wslab.at[_WQKV_OFF:_WQKV_OFF + H, :3 * H].set(wqkv)
    wslab = wslab.at[_WO_OFF:_WO_OFF + H, :H].set(params["Wo"])
    wslab = wslab.at[_W1_OFF:_W1_OFF + H, :FFN].set(params["W1"])
    wslab = wslab.at[_W2_OFF:_W2_OFF + FFN, :H].set(params["W2"])
    wslab = wslab.at[_WP_OFF:_WP_OFF + H, :H].set(params["Wp"])

    pslab = jnp.zeros((_PSLAB_ROWS, 128), jnp.float32)
    pslab = pslab.at[_LN_EMB_G, :H].set(params["ln_emb_g"])
    pslab = pslab.at[_LN_EMB_B, :H].set(params["ln_emb_b"])
    pslab = pslab.at[_LN1_G, :H].set(params["ln1_g"])
    pslab = pslab.at[_LN1_B, :H].set(params["ln1_b"])
    pslab = pslab.at[_LN2_G, :H].set(params["ln2_g"])
    pslab = pslab.at[_LN2_B, :H].set(params["ln2_b"])
    pslab = pslab.at[_BQKV, :3 * H].set(jnp.concatenate([params["bq"], params["bk"],
                                                         params["bv"]]))
    pslab = pslab.at[_BO, :H].set(params["bo"])
    pslab = pslab.at[_B1, :FFN].set(params["b1"])
    pslab = pslab.at[_B2, :H].set(params["b2"])
    pslab = pslab.at[_BP, :H].set(params["bp"])
    pslab = pslab.at[_WC, :H].set(params["Wc"].reshape(H))
    pslab = pslab.at[_BC, :1].set(params["bc"])
    return {"wslab": wslab, "pslab": pslab}


# ------------------------------ forward wrapper ------------------------------

def fine_tune_model_forward(packed, token_ids, segment_ids=None, attention_mask=None):
    B, S = token_ids.shape
    if segment_ids is None:
        segment_ids = jnp.zeros_like(token_ids)
    if attention_mask is None:
        attention_mask = jnp.ones((B, S), jnp.float32)
    attention_mask = attention_mask.astype(jnp.float32)

    # Tiny per-call glue: pack token / segment / position ids into one int32 input.
    pos_ids = jnp.broadcast_to(jnp.arange(S, dtype=jnp.int32)[None, :], (B, S))
    ids = jnp.stack([token_ids.astype(jnp.int32),
                     segment_ids.astype(jnp.int32),
                     pos_ids], axis=-1).reshape(B * S, 3)

    inputs = (ids, attention_mask, packed["pslab"], packed["wslab"])

    kernel = functools.partial(_fused_encoder_kernel, batch=B, seq=S,
                               num_heads=NUM_HEADS, head_dim=HEAD_DIM)

    # Advisory cost estimate so XLA does not mis-schedule the single fused custom call.
    bs = B * S
    mm_flops = 2 * bs * (VOCAB * HIDDEN + MAX_SEQ * HIDDEN + 3 * HIDDEN * HIDDEN
                         + HIDDEN * HIDDEN + HIDDEN * FFN + FFN * HIDDEN)
    attn_flops = 2 * B * NUM_HEADS * S * S * HEAD_DIM * 2
    pool_flops = 2 * B * HIDDEN * HIDDEN + 2 * B * HIDDEN + 2 * B * bs * HIDDEN
    flops = mm_flops + attn_flops + pool_flops
    transcendentals = B * NUM_HEADS * S * S + bs * FFN + B * HIDDEN + 4 * bs
    bytes_accessed = (ids.size * 4 + attention_mask.size * 4
                      + packed["pslab"].size * 4 + packed["wslab"].size * 4 + B * 4)

    return pl.pallas_call(
        kernel,
        out_shape=jax.ShapeDtypeStruct((B, 1), jnp.float32),
        grid=(1,),
        in_specs=[_full_spec(a.shape) for a in inputs],
        out_specs=_full_spec((B, 1)),
        scratch_shapes=[pltpu.VMEM((B, S, HIDDEN), jnp.float32)],   # attention context
        compiler_params=pltpu.CompilerParams(dimension_semantics=("arbitrary",)),
        cost_estimate=pl.CostEstimate(flops=flops,
                                      transcendentals=transcendentals,
                                      bytes_accessed=bytes_accessed),
    )(*inputs)


# --------------------------------- params ------------------------------------

def init_params(key):
    def nrm(key, shape):
        return 0.02 * jax.random.normal(key, shape, dtype=jnp.float32)

    keys = jax.random.split(key, 16)
    p = {
        "tok_emb": nrm(keys[0], (VOCAB, HIDDEN)),
        "seg_emb": nrm(keys[1], (NUM_SEGMENTS, HIDDEN)),
        "pos_emb": nrm(keys[2], (MAX_SEQ, HIDDEN)),
        "ln_emb_g": jnp.ones((HIDDEN,), jnp.float32),
        "ln_emb_b": jnp.zeros((HIDDEN,), jnp.float32),
        "Wq": nrm(keys[3], (HIDDEN, HIDDEN)), "bq": jnp.zeros((HIDDEN,), jnp.float32),
        "Wk": nrm(keys[4], (HIDDEN, HIDDEN)), "bk": jnp.zeros((HIDDEN,), jnp.float32),
        "Wv": nrm(keys[5], (HIDDEN, HIDDEN)), "bv": jnp.zeros((HIDDEN,), jnp.float32),
        "Wo": nrm(keys[6], (HIDDEN, HIDDEN)), "bo": jnp.zeros((HIDDEN,), jnp.float32),
        "ln1_g": jnp.ones((HIDDEN,), jnp.float32), "ln1_b": jnp.zeros((HIDDEN,), jnp.float32),
        "W1": nrm(keys[7], (HIDDEN, FFN)), "b1": jnp.zeros((FFN,), jnp.float32),
        "W2": nrm(keys[8], (FFN, HIDDEN)), "b2": jnp.zeros((HIDDEN,), jnp.float32),
        "ln2_g": jnp.ones((HIDDEN,), jnp.float32), "ln2_b": jnp.zeros((HIDDEN,), jnp.float32),
        "Wp": nrm(keys[9], (HIDDEN, HIDDEN)), "bp": jnp.zeros((HIDDEN,), jnp.float32),
        # FineTuneModel: new classification layer = nn.Linear(hidden_size, 1)
        "Wc": nrm(keys[10], (HIDDEN, 1)), "bc": jnp.zeros((1,), jnp.float32),
    }
    return p


# ---------------------------------- main ------------------------------------

if __name__ == "__main__":
    key = jax.random.PRNGKey(0)
    pkey, ikey = jax.random.split(key)
    params = init_params(pkey)
    packed = pack_params(params)     # one-time parameter repacking (not per forward call)

    B, S = 2, 8
    token_ids = jax.random.randint(ikey, (B, S), 0, VOCAB, dtype=jnp.int32)
    segment_ids = jnp.zeros((B, S), jnp.int32)
    attention_mask = jnp.ones((B, S), jnp.float32).at[1, -2:].set(0.0)

    fwd = jax.jit(fine_tune_model_forward)
    out = fwd(packed, token_ids, segment_ids, attention_mask)
    out = jax.block_until_ready(out)

    assert out.shape == (B, 1) and out.dtype == jnp.float32
    assert bool(jnp.all(jnp.isfinite(out)))
    print("KERNEL_OK")
</pallas_src>

<mosaic_0001>
module attributes {stable_mosaic.version = 11 : i64} {
  func.func @_fused_encoder_kernel(%arg0: i32, %arg1: memref<16x3xi32, #tpu.memory_space<vmem>>, %arg2: memref<2x8xf32, #tpu.memory_space<vmem>>, %arg3: memref<16x128xf32, #tpu.memory_space<vmem>>, %arg4: memref<280x128xf32, #tpu.memory_space<vmem>>, %arg5: memref<2x1xf32, #tpu.memory_space<vmem>>, %arg6: memref<2x8x32xf32, #tpu.memory_space<vmem>>) attributes {dimension_semantics = [#tpu.dimension_semantics<arbitrary>], iteration_bounds = array<i64: 1>, scalar_prefetch = 0 : i64, scratch_operands = 1 : i64, tpu.core_type = #tpu.core_type<tc>, window_params = [{pipeline_mode = #tpu.pipeline_mode<synchronous>, transform_indices = @transform_0, window_bounds = array<i64: 16, 3>}, {pipeline_mode = #tpu.pipeline_mode<synchronous>, transform_indices = @transform_1, window_bounds = array<i64: 2, 8>}, {pipeline_mode = #tpu.pipeline_mode<synchronous>, transform_indices = @transform_2, window_bounds = array<i64: 16, 128>}, {pipeline_mode = #tpu.pipeline_mode<synchronous>, transform_indices = @transform_3, window_bounds = array<i64: 280, 128>}, {pipeline_mode = #tpu.pipeline_mode<synchronous>, transform_indices = @transform_4, window_bounds = array<i64: 2, 1>}]} {
    %c0 = arith.constant 0 : index
    %c0_0 = arith.constant 0 : index
    %0 = vector.load %arg1[%c0, %c0_0] : memref<16x3xi32, #tpu.memory_space<vmem>>, vector<16x3xi32>
    %1 = vector.extract_strided_slice %0 {offsets = [0, 0], sizes = [16, 1], strides = [1, 1]} : vector<16x3xi32> to vector<16x1xi32>
    %2 = tpu.iota {dimensions = array<i32: 1>} : vector<16x64xi32>
    %3 = vector.broadcast %1 : vector<16x1xi32> to vector<16x64xi32>
    %4 = arith.cmpi eq, %3, %2 : vector<16x64xi32>
    %5 = arith.extui %4 : vector<16x64xi1> to vector<16x64xi32>
    %6 = arith.sitofp %5 : vector<16x64xi32> to vector<16x64xf32>
    %7 = vector.extract_strided_slice %0 {offsets = [0, 2], sizes = [16, 1], strides = [1, 1]} : vector<16x3xi32> to vector<16x1xi32>
    %8 = tpu.iota {dimensions = array<i32: 1>} : vector<16x16xi32>
    %9 = vector.broadcast %7 : vector<16x1xi32> to vector<16x16xi32>
    %10 = arith.cmpi eq, %9, %8 : vector<16x16xi32>
    %11 = arith.extui %10 : vector<16x16xi1> to vector<16x16xi32>
    %12 = arith.sitofp %11 : vector<16x16xi32> to vector<16x16xf32>
    %13 = vector.extract_strided_slice %0 {offsets = [0, 1], sizes = [16, 1], strides = [1, 1]} : vector<16x3xi32> to vector<16x1xi32>
    %14 = arith.sitofp %13 : vector<16x1xi32> to vector<16x1xf32>
    %c0_1 = arith.constant 0 : index
    %c0_2 = arith.constant 0 : index
    %15 = vector.load %arg4[%c0_1, %c0_2] : memref<280x128xf32, #tpu.memory_space<vmem>>, vector<64x32xf32>
    %c64 = arith.constant 64 : index
    %c0_3 = arith.constant 0 : index
    %16 = vector.load %arg4[%c64, %c0_3] : memref<280x128xf32, #tpu.memory_space<vmem>>, vector<16x32xf32>
    %c80 = arith.constant 80 : index
    %c0_4 = arith.constant 0 : index
    %17 = vector.load %arg4[%c80, %c0_4] : memref<280x128xf32, #tpu.memory_space<vmem>>, vector<2x32xf32>
    %cst = arith.constant dense<0.000000e+00> : vector<16x32xf32>
    %18 = tpu.matmul %6, %15, %cst {dimension_numbers = #tpu.dot_dimension_numbers<[1], [0], [0], [1], [0, 0, 1, 1], [], []>} : vector<16x64xf32>, vector<64x32xf32>, vector<16x32xf32> -> vector<16x32xf32>
    %cst_5 = arith.constant dense<0.000000e+00> : vector<16x32xf32>
    %19 = tpu.matmul %12, %16, %cst_5 {dimension_numbers = #tpu.dot_dimension_numbers<[1], [0], [0], [1], [0, 0, 1, 1], [], []>} : vector<16x16xf32>, vector<16x32xf32>, vector<16x32xf32> -> vector<16x32xf32>
    %20 = arith.addf %18, %19 : vector<16x32xf32>
    %cst_6 = arith.constant 1.000000e+00 : f32
    %21 = vector.broadcast %cst_6 : f32 to vector<16x1xf32>
    %22 = arith.subf %21, %14 : vector<16x1xf32>
    %23 = vector.extract_strided_slice %17 {offsets = [0, 0], sizes = [1, 32], strides = [1, 1]} : vector<2x32xf32> to vector<1x32xf32>
    %24 = vector.broadcast %22 : vector<16x1xf32> to vector<16x32xf32>
    %25 = vector.broadcast %23 : vector<1x32xf32> to vector<16x32xf32>
    %26 = arith.mulf %24, %25 : vector<16x32xf32>
    %27 = arith.addf %20, %26 : vector<16x32xf32>
    %28 = vector.extract_strided_slice %17 {offsets = [1, 0], sizes = [1, 32], strides = [1, 1]} : vector<2x32xf32> to vector<1x32xf32>
    %29 = vector.broadcast %14 : vector<16x1xf32> to vector<16x32xf32>
    %30 = vector.broadcast %28 : vector<1x32xf32> to vector<16x32xf32>
    %31 = arith.mulf %29, %30 : vector<16x32xf32>
    %32 = arith.addf %27, %31 : vector<16x32xf32>
    %c0_7 = arith.constant 0 : index
    %c0_8 = arith.constant 0 : index
    %33 = vector.load %arg3[%c0_7, %c0_8] : memref<16x128xf32, #tpu.memory_space<vmem>>, vector<1x32xf32>
    %c1 = arith.constant 1 : index
    %c0_9 = arith.constant 0 : index
    %34 = vector.load %arg3[%c1, %c0_9] : memref<16x128xf32, #tpu.memory_space<vmem>>, vector<1x32xf32>
    %cst_10 = arith.constant dense<0.000000e+00> : vector<16xf32>
    %35 = vector.multi_reduction <add>, %32, %cst_10 [1] : vector<16x32xf32> to vector<16xf32>
    %36 = vector.shape_cast %35 : vector<16xf32> to vector<16x1xf32>
    %cst_11 = arith.constant 3.200000e+01 : f32
    %37 = vector.broadcast %cst_11 : f32 to vector<16x1xf32>
    %38 = arith.divf %36, %37 : vector<16x1xf32>
    %39 = vector.broadcast %38 : vector<16x1xf32> to vector<16x32xf32>
    %40 = arith.subf %32, %39 : vector<16x32xf32>
    %41 = vector.broadcast %38 : vector<16x1xf32> to vector<16x32xf32>
    %42 = arith.subf %32, %41 : vector<16x32xf32>
    %43 = arith.mulf %40, %42 : vector<16x32xf32>
    %cst_12 = arith.constant dense<0.000000e+00> : vector<16xf32>
    %44 = vector.multi_reduction <add>, %43, %cst_12 [1] : vector<16x32xf32> to vector<16xf32>
    %45 = vector.shape_cast %44 : vector<16xf32> to vector<16x1xf32>
    %cst_13 = arith.constant 3.200000e+01 : f32
    %46 = vector.broadcast %cst_13 : f32 to vector<16x1xf32>
    %47 = arith.divf %45, %46 : vector<16x1xf32>
    %48 = vector.broadcast %38 : vector<16x1xf32> to vector<16x32xf32>
    %49 = arith.subf %32, %48 : vector<16x32xf32>
    %cst_14 = arith.constant 9.99999996E-13 : f32
    %50 = vector.broadcast %cst_14 : f32 to vector<16x1xf32>
    %51 = arith.addf %47, %50 : vector<16x1xf32>
    %52 = math.rsqrt %51 : vector<16x1xf32>
    %53 = vector.broadcast %52 : vector<16x1xf32> to vector<16x32xf32>
    %54 = arith.mulf %49, %53 : vector<16x32xf32>
    %55 = vector.broadcast %33 : vector<1x32xf32> to vector<16x32xf32>
    %56 = arith.mulf %54, %55 : vector<16x32xf32>
    %57 = vector.broadcast %34 : vector<1x32xf32> to vector<16x32xf32>
    %58 = arith.addf %56, %57 : vector<16x32xf32>
    %c88 = arith.constant 88 : index
    %c0_15 = arith.constant 0 : index
    %59 = vector.load %arg4[%c88, %c0_15] : memref<280x128xf32, #tpu.memory_space<vmem>>, vector<32x96xf32>
    %60 = arith.truncf %58 : vector<16x32xf32> to vector<16x32xbf16>
    %61 = arith.truncf %59 : vector<32x96xf32> to vector<32x96xbf16>
    %cst_16 = arith.constant dense<0.000000e+00> : vector<16x96xf32>
    %62 = tpu.matmul %60, %61, %cst_16 {dimension_numbers = #tpu.dot_dimension_numbers<[1], [0], [0], [1], [0, 0, 1, 1], [], []>} : vector<16x32xbf16>, vector<32x96xbf16>, vector<16x96xf32> -> vector<16x96xf32>
    %c6 = arith.constant 6 : index
    %c0_17 = arith.constant 0 : index
    %63 = vector.load %arg3[%c6, %c0_17] : memref<16x128xf32, #tpu.memory_space<vmem>>, vector<1x96xf32>
    %64 = vector.broadcast %63 : vector<1x96xf32> to vector<16x96xf32>
    %65 = arith.addf %62, %64 : vector<16x96xf32>
    %66 = vector.shape_cast %65 : vector<16x96xf32> to vector<2x8x96xf32>
    %c0_18 = arith.constant 0 : index
    %c0_19 = arith.constant 0 : index
    %67 = vector.load %arg2[%c0_18, %c0_19] : memref<2x8xf32, #tpu.memory_space<vmem>>, vector<2x8xf32>
    %cst_20 = arith.constant 1.000000e+00 : f32
    %68 = vector.broadcast %cst_20 : f32 to vector<2x8xf32>
    %69 = arith.subf %68, %67 : vector<2x8xf32>
    %cst_21 = arith.constant -1.000000e+04 : f32
    %70 = vector.broadcast %cst_21 : f32 to vector<2x8xf32>
    %71 = arith.mulf %69, %70 : vector<2x8xf32>
    %72 = vector.shape_cast %71 : vector<2x8xf32> to vector<2x1x8xf32>
    %73 = vector.extract_strided_slice %66 {offsets = [0, 0, 0], sizes = [2, 8, 16], strides = [1, 1, 1]} : vector<2x8x96xf32> to vector<2x8x16xf32>
    %74 = vector.extract_strided_slice %66 {offsets = [0, 0, 32], sizes = [2, 8, 16], strides = [1, 1, 1]} : vector<2x8x96xf32> to vector<2x8x16xf32>
    %75 = vector.extract_strided_slice %66 {offsets = [0, 0, 64], sizes = [2, 8, 16], strides = [1, 1, 1]} : vector<2x8x96xf32> to vector<2x8x16xf32>
    "tpu.trace_start"() <{level = 10 : i32, message = "bqd,bkd->bqk"}> : () -> ()
    %cst_22 = arith.constant dense<0.000000e+00> : vector<2x8x8xf32>
    %76 = tpu.matmul %73, %74, %cst_22 {dimension_numbers = #tpu.dot_dimension_numbers<[2], [2], [1], [1], [0, 0, 0, 1, 1, 1], [0], [0]>} : vector<2x8x16xf32>, vector<2x8x16xf32>, vector<2x8x8xf32> -> vector<2x8x8xf32>
    "tpu.trace_stop"() : () -> ()
    %cst_23 = arith.constant 2.500000e-01 : f32
    %77 = vector.broadcast %cst_23 : f32 to vector<2x8x8xf32>
    %78 = arith.mulf %76, %77 : vector<2x8x8xf32>
    %79 = vector.broadcast %72 : vector<2x1x8xf32> to vector<2x8x8xf32>
    %80 = arith.addf %78, %79 : vector<2x8x8xf32>
    %cst_24 = arith.constant dense<0xFF800000> : vector<2x8xf32>
    %81 = vector.multi_reduction <maximumf>, %80, %cst_24 [2] : vector<2x8x8xf32> to vector<2x8xf32>
    %82 = vector.shape_cast %81 : vector<2x8xf32> to vector<2x8x1xf32>
    %83 = vector.broadcast %82 : vector<2x8x1xf32> to vector<2x8x8xf32>
    %84 = arith.subf %80, %83 : vector<2x8x8xf32>
    %85 = math.exp %84 : vector<2x8x8xf32>
    %cst_25 = arith.constant dense<0.000000e+00> : vector<2x8xf32>
    %86 = vector.multi_reduction <add>, %85, %cst_25 [2] : vector<2x8x8xf32> to vector<2x8xf32>
    %87 = vector.shape_cast %86 : vector<2x8xf32> to vector<2x8x1xf32>
    %88 = vector.broadcast %87 : vector<2x8x1xf32> to vector<2x8x8xf32>
    %89 = arith.divf %85, %88 : vector<2x8x8xf32>
    "tpu.trace_start"() <{level = 10 : i32, message = "bqk,bkd->bqd"}> : () -> ()
    %cst_26 = arith.constant dense<0.000000e+00> : vector<2x8x16xf32>
    %90 = tpu.matmul %89, %75, %cst_26 {dimension_numbers = #tpu.dot_dimension_numbers<[2], [1], [1], [2], [0, 0, 0, 1, 1, 2], [0], [0]>} : vector<2x8x8xf32>, vector<2x8x16xf32>, vector<2x8x16xf32> -> vector<2x8x16xf32>
    "tpu.trace_stop"() : () -> ()
    %c0_27 = arith.constant 0 : index
    %c0_28 = arith.constant 0 : index
    %c0_29 = arith.constant 0 : index
    %91 = vector.load %arg6[%c0_27, %c0_28, %c0_29] : memref<2x8x32xf32, #tpu.memory_space<vmem>>, vector<2x8x16xf32>
    tpu.vector_store %arg6[%c0_27, %c0_28, %c0_29], %90 {strides = array<i32>} : memref<2x8x32xf32, #tpu.memory_space<vmem>>, vector<2x8x16xf32>,
    %92 = vector.extract_strided_slice %66 {offsets = [0, 0, 16], sizes = [2, 8, 16], strides = [1, 1, 1]} : vector<2x8x96xf32> to vector<2x8x16xf32>
    %93 = vector.extract_strided_slice %66 {offsets = [0, 0, 48], sizes = [2, 8, 16], strides = [1, 1, 1]} : vector<2x8x96xf32> to vector<2x8x16xf32>
    %94 = vector.extract_strided_slice %66 {offsets = [0, 0, 80], sizes = [2, 8, 16], strides = [1, 1, 1]} : vector<2x8x96xf32> to vector<2x8x16xf32>
    "tpu.trace_start"() <{level = 10 : i32, message = "bqd,bkd->bqk"}> : () -> ()
    %cst_30 = arith.constant dense<0.000000e+00> : vector<2x8x8xf32>
    %95 = tpu.matmul %92, %93, %cst_30 {dimension_numbers = #tpu.dot_dimension_numbers<[2], [2], [1], [1], [0, 0, 0, 1, 1, 1], [0], [0]>} : vector<2x8x16xf32>, vector<2x8x16xf32>, vector<2x8x8xf32> -> vector<2x8x8xf32>
    "tpu.trace_stop"() : () -> ()
    %cst_31 = arith.constant 2.500000e-01 : f32
    %96 = vector.broadcast %cst_31 : f32 to vector<2x8x8xf32>
    %97 = arith.mulf %95, %96 : vector<2x8x8xf32>
    %98 = vector.broadcast %72 : vector<2x1x8xf32> to vector<2x8x8xf32>
    %99 = arith.addf %97, %98 : vector<2x8x8xf32>
    %cst_32 = arith.constant dense<0xFF800000> : vector<2x8xf32>
    %100 = vector.multi_reduction <maximumf>, %99, %cst_32 [2] : vector<2x8x8xf32> to vector<2x8xf32>
    %101 = vector.shape_cast %100 : vector<2x8xf32> to vector<2x8x1xf32>
    %102 = vector.broadcast %101 : vector<2x8x1xf32> to vector<2x8x8xf32>
    %103 = arith.subf %99, %102 : vector<2x8x8xf32>
    %104 = math.exp %103 : vector<2x8x8xf32>
    %cst_33 = arith.constant dense<0.000000e+00> : vector<2x8xf32>
    %105 = vector.multi_reduction <add>, %104, %cst_33 [2] : vector<2x8x8xf32> to vector<2x8xf32>
    %106 = vector.shape_cast %105 : vector<2x8xf32> to vector<2x8x1xf32>
    %107 = vector.broadcast %106 : vector<2x8x1xf32> to vector<2x8x8xf32>
    %108 = arith.divf %104, %107 : vector<2x8x8xf32>
    "tpu.trace_start"() <{level = 10 : i32, message = "bqk,bkd->bqd"}> : () -> ()
    %cst_34 = arith.constant dense<0.000000e+00> : vector<2x8x16xf32>
    %109 = tpu.matmul %108, %94, %cst_34 {dimension_numbers = #tpu.dot_dimension_numbers<[2], [1], [1], [2], [0, 0, 0, 1, 1, 2], [0], [0]>} : vector<2x8x8xf32>, vector<2x8x16xf32>, vector<2x8x16xf32> -> vector<2x8x16xf32>
    "tpu.trace_stop"() : () -> ()
    %c0_35 = arith.constant 0 : index
    %c0_36 = arith.constant 0 : index
    %c16 = arith.constant 16 : index
    %110 = vector.load %arg6[%c0_35, %c0_36, %c16] : memref<2x8x32xf32, #tpu.memory_space<vmem>>, vector<2x8x16xf32>
    tpu.vector_store %arg6[%c0_35, %c0_36, %c16], %109 {strides = array<i32>} : memref<2x8x32xf32, #tpu.memory_space<vmem>>, vector<2x8x16xf32>,
    %c0_37 = arith.constant 0 : index
    %c0_38 = arith.constant 0 : index
    %c0_39 = arith.constant 0 : index
    %111 = vector.load %arg6[%c0_37, %c0_38, %c0_39] : memref<2x8x32xf32, #tpu.memory_space<vmem>>, vector<2x8x32xf32>
    %112 = vector.shape_cast %111 : vector<2x8x32xf32> to vector<16x32xf32>
    %c120 = arith.constant 120 : index
    %c0_40 = arith.constant 0 : index
    %113 = vector.load %arg4[%c120, %c0_40] : memref<280x128xf32, #tpu.memory_space<vmem>>, vector<32x32xf32>
    %114 = arith.truncf %112 : vector<16x32xf32> to vector<16x32xbf16>
    %115 = arith.truncf %113 : vector<32x32xf32> to vector<32x32xbf16>
    %cst_41 = arith.constant dense<0.000000e+00> : vector<16x32xf32>
    %116 = tpu.matmul %114, %115, %cst_41 {dimension_numbers = #tpu.dot_dimension_numbers<[1], [0], [0], [1], [0, 0, 1, 1], [], []>} : vector<16x32xbf16>, vector<32x32xbf16>, vector<16x32xf32> -> vector<16x32xf32>
    %c7 = arith.constant 7 : index
    %c0_42 = arith.constant 0 : index
    %117 = vector.load %arg3[%c7, %c0_42] : memref<16x128xf32, #tpu.memory_space<vmem>>, vector<1x32xf32>
    %118 = vector.broadcast %117 : vector<1x32xf32> to vector<16x32xf32>
    %119 = arith.addf %116, %118 : vector<16x32xf32>
    %120 = arith.addf %58, %119 : vector<16x32xf32>
    %c2 = arith.constant 2 : index
    %c0_43 = arith.constant 0 : index
    %121 = vector.load %arg3[%c2, %c0_43] : memref<16x128xf32, #tpu.memory_space<vmem>>, vector<1x32xf32>
    %c3 = arith.constant 3 : index
    %c0_44 = arith.constant 0 : index
    %122 = vector.load %arg3[%c3, %c0_44] : memref<16x128xf32, #tpu.memory_space<vmem>>, vector<1x32xf32>
    %cst_45 = arith.constant dense<0.000000e+00> : vector<16xf32>
    %123 = vector.multi_reduction <add>, %120, %cst_45 [1] : vector<16x32xf32> to vector<16xf32>
    %124 = vector.shape_cast %123 : vector<16xf32> to vector<16x1xf32>
    %cst_46 = arith.constant 3.200000e+01 : f32
    %125 = vector.broadcast %cst_46 : f32 to vector<16x1xf32>
    %126 = arith.divf %124, %125 : vector<16x1xf32>
    %127 = vector.broadcast %126 : vector<16x1xf32> to vector<16x32xf32>
    %128 = arith.subf %120, %127 : vector<16x32xf32>
    %129 = vector.broadcast %126 : vector<16x1xf32> to vector<16x32xf32>
    %130 = arith.subf %120, %129 : vector<16x32xf32>
    %131 = arith.mulf %128, %130 : vector<16x32xf32>
    %cst_47 = arith.constant dense<0.000000e+00> : vector<16xf32>
    %132 = vector.multi_reduction <add>, %131, %cst_47 [1] : vector<16x32xf32> to vector<16xf32>
    %133 = vector.shape_cast %132 : vector<16xf32> to vector<16x1xf32>
    %cst_48 = arith.constant 3.200000e+01 : f32
    %134 = vector.broadcast %cst_48 : f32 to vector<16x1xf32>
    %135 = arith.divf %133, %134 : vector<16x1xf32>
    %136 = vector.broadcast %126 : vector<16x1xf32> to vector<16x32xf32>
    %137 = arith.subf %120, %136 : vector<16x32xf32>
    %cst_49 = arith.constant 9.99999996E-13 : f32
    %138 = vector.broadcast %cst_49 : f32 to vector<16x1xf32>
    %139 = arith.addf %135, %138 : vector<16x1xf32>
    %140 = math.rsqrt %139 : vector<16x1xf32>
    %141 = vector.broadcast %140 : vector<16x1xf32> to vector<16x32xf32>
    %142 = arith.mulf %137, %141 : vector<16x32xf32>
    %143 = vector.broadcast %121 : vector<1x32xf32> to vector<16x32xf32>
    %144 = arith.mulf %142, %143 : vector<16x32xf32>
    %145 = vector.broadcast %122 : vector<1x32xf32> to vector<16x32xf32>
    %146 = arith.addf %144, %145 : vector<16x32xf32>
    %c152 = arith.constant 152 : index
    %c0_50 = arith.constant 0 : index
    %147 = vector.load %arg4[%c152, %c0_50] : memref<280x128xf32, #tpu.memory_space<vmem>>, vector<32x64xf32>
    %148 = arith.truncf %146 : vector<16x32xf32> to vector<16x32xbf16>
    %149 = arith.truncf %147 : vector<32x64xf32> to vector<32x64xbf16>
    %cst_51 = arith.constant dense<0.000000e+00> : vector<16x64xf32>
    %150 = tpu.matmul %148, %149, %cst_51 {dimension_numbers = #tpu.dot_dimension_numbers<[1], [0], [0], [1], [0, 0, 1, 1], [], []>} : vector<16x32xbf16>, vector<32x64xbf16>, vector<16x64xf32> -> vector<16x64xf32>
    %c8 = arith.constant 8 : index
    %c0_52 = arith.constant 0 : index
    %151 = vector.load %arg3[%c8, %c0_52] : memref<16x128xf32, #tpu.memory_space<vmem>>, vector<1x64xf32>
    %152 = vector.broadcast %151 : vector<1x64xf32> to vector<16x64xf32>
    %153 = arith.addf %150, %152 : vector<16x64xf32>
    %cst_53 = arith.constant 5.000000e-01 : f32
    %154 = vector.broadcast %cst_53 : f32 to vector<16x64xf32>
    %155 = arith.mulf %154, %153 : vector<16x64xf32>
    %cst_54 = arith.constant 4.471500e-02 : f32
    %156 = vector.broadcast %cst_54 : f32 to vector<16x64xf32>
    %157 = arith.mulf %156, %153 : vector<16x64xf32>
    %158 = arith.mulf %157, %153 : vector<16x64xf32>
    %159 = arith.mulf %158, %153 : vector<16x64xf32>
    %160 = arith.addf %153, %159 : vector<16x64xf32>
    %cst_55 = arith.constant 0.797884583 : f32
    %161 = vector.broadcast %cst_55 : f32 to vector<16x64xf32>
    %162 = arith.mulf %161, %160 : vector<16x64xf32>
    %163 = math.tanh %162 : vector<16x64xf32>
    %cst_56 = arith.constant 1.000000e+00 : f32
    %164 = vector.broadcast %cst_56 : f32 to vector<16x64xf32>
    %165 = arith.addf %164, %163 : vector<16x64xf32>
    %166 = arith.mulf %155, %165 : vector<16x64xf32>
    %c184 = arith.constant 184 : index
    %c0_57 = arith.constant 0 : index
    %167 = vector.load %arg4[%c184, %c0_57] : memref<280x128xf32, #tpu.memory_space<vmem>>, vector<64x32xf32>
    %168 = arith.truncf %166 : vector<16x64xf32> to vector<16x64xbf16>
    %169 = arith.truncf %167 : vector<64x32xf32> to vector<64x32xbf16>
    %cst_58 = arith.constant dense<0.000000e+00> : vector<16x32xf32>
    %170 = tpu.matmul %168, %169, %cst_58 {dimension_numbers = #tpu.dot_dimension_numbers<[1], [0], [0], [1], [0, 0, 1, 1], [], []>} : vector<16x64xbf16>, vector<64x32xbf16>, vector<16x32xf32> -> vector<16x32xf32>
    %c9 = arith.constant 9 : index
    %c0_59 = arith.constant 0 : index
    %171 = vector.load %arg3[%c9, %c0_59] : memref<16x128xf32, #tpu.memory_space<vmem>>, vector<1x32xf32>
    %172 = vector.broadcast %171 : vector<1x32xf32> to vector<16x32xf32>
    %173 = arith.addf %170, %172 : vector<16x32xf32>
    %174 = arith.addf %146, %173 : vector<16x32xf32>
    %c4 = arith.constant 4 : index
    %c0_60 = arith.constant 0 : index
    %175 = vector.load %arg3[%c4, %c0_60] : memref<16x128xf32, #tpu.memory_space<vmem>>, vector<1x32xf32>
    %c5 = arith.constant 5 : index
    %c0_61 = arith.constant 0 : index
    %176 = vector.load %arg3[%c5, %c0_61] : memref<16x128xf32, #tpu.memory_space<vmem>>, vector<1x32xf32>
    %cst_62 = arith.constant dense<0.000000e+00> : vector<16xf32>
    %177 = vector.multi_reduction <add>, %174, %cst_62 [1] : vector<16x32xf32> to vector<16xf32>
    %178 = vector.shape_cast %177 : vector<16xf32> to vector<16x1xf32>
    %cst_63 = arith.constant 3.200000e+01 : f32
    %179 = vector.broadcast %cst_63 : f32 to vector<16x1xf32>
    %180 = arith.divf %178, %179 : vector<16x1xf32>
    %181 = vector.broadcast %180 : vector<16x1xf32> to vector<16x32xf32>
    %182 = arith.subf %174, %181 : vector<16x32xf32>
    %183 = vector.broadcast %180 : vector<16x1xf32> to vector<16x32xf32>
    %184 = arith.subf %174, %183 : vector<16x32xf32>
    %185 = arith.mulf %182, %184 : vector<16x32xf32>
    %cst_64 = arith.constant dense<0.000000e+00> : vector<16xf32>
    %186 = vector.multi_reduction <add>, %185, %cst_64 [1] : vector<16x32xf32> to vector<16xf32>
    %187 = vector.shape_cast %186 : vector<16xf32> to vector<16x1xf32>
    %cst_65 = arith.constant 3.200000e+01 : f32
    %188 = vector.broadcast %cst_65 : f32 to vector<16x1xf32>
    %189 = arith.divf %187, %188 : vector<16x1xf32>
    %190 = vector.broadcast %180 : vector<16x1xf32> to vector<16x32xf32>
    %191 = arith.subf %174, %190 : vector<16x32xf32>
    %cst_66 = arith.constant 9.99999996E-13 : f32
    %192 = vector.broadcast %cst_66 : f32 to vector<16x1xf32>
    %193 = arith.addf %189, %192 : vector<16x1xf32>
    %194 = math.rsqrt %193 : vector<16x1xf32>
    %195 = vector.broadcast %194 : vector<16x1xf32> to vector<16x32xf32>
    %196 = arith.mulf %191, %195 : vector<16x32xf32>
    %197 = vector.broadcast %175 : vector<1x32xf32> to vector<16x32xf32>
    %198 = arith.mulf %196, %197 : vector<16x32xf32>
    %199 = vector.broadcast %176 : vector<1x32xf32> to vector<16x32xf32>
    %200 = arith.addf %198, %199 : vector<16x32xf32>
    %201 = tpu.iota {dimensions = array<i32: 1>} : vector<2x16xi32>
    %202 = tpu.iota {dimensions = array<i32: 0>} : vector<2x16xi32>
    %c8_i32 = arith.constant 8 : i32
    %203 = vector.broadcast %c8_i32 : i32 to vector<2x16xi32>
    %204 = arith.muli %203, %202 : vector<2x16xi32>
    %205 = arith.cmpi eq, %201, %204 : vector<2x16xi32>
    %206 = arith.extui %205 : vector<2x16xi1> to vector<2x16xi32>
    %207 = arith.sitofp %206 : vector<2x16xi32> to vector<2x16xf32>
    %cst_67 = arith.constant dense<0.000000e+00> : vector<2x32xf32>
    %208 = tpu.matmul %207, %200, %cst_67 {dimension_numbers = #tpu.dot_dimension_numbers<[1], [0], [0], [1], [0, 0, 1, 1], [], []>} : vector<2x16xf32>, vector<16x32xf32>, vector<2x32xf32> -> vector<2x32xf32>
    %c248 = arith.constant 248 : index
    %c0_68 = arith.constant 0 : index
    %209 = vector.load %arg4[%c248, %c0_68] : memref<280x128xf32, #tpu.memory_space<vmem>>, vector<32x32xf32>
    %210 = arith.truncf %208 : vector<2x32xf32> to vector<2x32xbf16>
    %211 = arith.truncf %209 : vector<32x32xf32> to vector<32x32xbf16>
    %cst_69 = arith.constant dense<0.000000e+00> : vector<2x32xf32>
    %212 = tpu.matmul %210, %211, %cst_69 {dimension_numbers = #tpu.dot_dimension_numbers<[1], [0], [0], [1], [0, 0, 1, 1], [], []>} : vector<2x32xbf16>, vector<32x32xbf16>, vector<2x32xf32> -> vector<2x32xf32>
    %c10 = arith.constant 10 : index
    %c0_70 = arith.constant 0 : index
    %213 = vector.load %arg3[%c10, %c0_70] : memref<16x128xf32, #tpu.memory_space<vmem>>, vector<1x32xf32>
    %214 = vector.broadcast %213 : vector<1x32xf32> to vector<2x32xf32>
    %215 = arith.addf %212, %214 : vector<2x32xf32>
    %216 = math.tanh %215 : vector<2x32xf32>
    %c11 = arith.constant 11 : index
    %c0_71 = arith.constant 0 : index
    %217 = vector.load %arg3[%c11, %c0_71] : memref<16x128xf32, #tpu.memory_space<vmem>>, vector<1x32xf32>
    %218 = vector.broadcast %217 : vector<1x32xf32> to vector<2x32xf32>
    %219 = arith.mulf %216, %218 : vector<2x32xf32>
    %cst_72 = arith.constant dense<0.000000e+00> : vector<2xf32>
    %220 = vector.multi_reduction <add>, %219, %cst_72 [1] : vector<2x32xf32> to vector<2xf32>
    %221 = vector.shape_cast %220 : vector<2xf32> to vector<2x1xf32>
    %c12 = arith.constant 12 : index
    %c0_73 = arith.constant 0 : index
    %222 = vector.load %arg3[%c12, %c0_73] : memref<16x128xf32, #tpu.memory_space<vmem>>, vector<1x1xf32>
    %223 = vector.broadcast %222 : vector<1x1xf32> to vector<2x1xf32>
    %224 = arith.addf %221, %223 : vector<2x1xf32>
    %c0_74 = arith.constant 0 : index
    %c0_75 = arith.constant 0 : index
    %225 = vector.load %arg5[%c0_74, %c0_75] : memref<2x1xf32, #tpu.memory_space<vmem>>, vector<2x1xf32>
    tpu.vector_store %arg5[%c0_74, %c0_75], %224 {strides = array<i32>} : memref<2x1xf32, #tpu.memory_space<vmem>>, vector<2x1xf32>,
    return
  }
  func.func @transform_0(%arg0: i32) -> (i32, i32) {
    %c0_i32 = arith.constant 0 : i32
    %c0_i32_0 = arith.constant 0 : i32
    %c0_i32_1 = arith.constant 0 : i32
    return %c0_i32, %c0_i32_0 : i32, i32
  }
  func.func @transform_1(%arg0: i32) -> (i32, i32) {
    %c0_i32 = arith.constant 0 : i32
    %c0_i32_0 = arith.constant 0 : i32
    %c0_i32_1 = arith.constant 0 : i32
    return %c0_i32, %c0_i32_0 : i32, i32
  }
  func.func @transform_2(%arg0: i32) -> (i32, i32) {
    %c0_i32 = arith.constant 0 : i32
    %c0_i32_0 = arith.constant 0 : i32
    %c0_i32_1 = arith.constant 0 : i32
    return %c0_i32, %c0_i32_0 : i32, i32
  }
  func.func @transform_3(%arg0: i32) -> (i32, i32) {
    %c0_i32 = arith.constant 0 : i32
    %c0_i32_0 = arith.constant 0 : i32
    %c0_i32_1 = arith.constant 0 : i32
    return %c0_i32, %c0_i32_0 : i32, i32
  }
  func.func @transform_4(%arg0: i32) -> (i32, i32) {
    %c0_i32 = arith.constant 0 : i32
    %c0_i32_0 = arith.constant 0 : i32
    %c0_i32_1 = arith.constant 0 : i32
    return %c0_i32, %c0_i32_0 : i32, i32
  }
}

</mosaic_0001>

<llo_original>
// kernel: fine_tune_model_forward.1
$region0: #{fine_tune_model_forward.1}
  #allocation0 [shape = 'u32[]', space=smem, size = 0x4, offset = 0x4, fixed_abs, tag = 'smem constant byte address 0x4 - core index']
  #allocation1 [shape = 'u32[72,128]{1,0:T(1,128)}', space=vmem, size = 0x9000, scoped, tag = 'internal scratch']
  #allocation2 [shape = 'f32[2,8,32]{2,1,0:T(8,128)}', space=vmem, size = 0x2000, scoped, tag = 'scratch operand']
  %s0 = inlined_call_operand.vmem [shape: s32[16,3], index: 0, kind: input, shape index: {}]
  %s1 = inlined_call_operand.vmem [shape: f32[2,8], index: 1, kind: input, shape index: {}]
  %s2 = inlined_call_operand.vmem [shape: f32[16,128], index: 2, kind: input, shape index: {}]
  %s3 = inlined_call_operand.hbm [shape: f32[280,128], index: 3, kind: input, shape index: {}]
  %s4 = inlined_call_operand.vmem [shape: f32[2,1], index: 4, kind: output, shape index: {}]
  %s5 = sld [smem:[#allocation0]]
  $region30: #{fine_tune_model_forward.1} parent=0
    _
  %s7 = ssub.s32 1, %s5
  %s8 = scalar_select 0, %s7, %s5
  $region1: #{fine_tune_model_forward.1} parent=0
    #allocation3 [shape = 'u8[143360]{0}', space=vmem, size = 0x23000, scoped, tag = 'input window, operand 3, single buffered']
    #allocation4 [shape = 's32[1]{0}', space=sflag, size = 0x4, scoped, tag = 'scoped memory for fine_tune_model_forward.1']
    %9 = vsyncpa [#allocation4], 0
    // Predicated region
    $region2: #{fine_tune_model_forward.1} parent=1 // pred_check
      _
    $region3: #{fine_tune_model_forward.1} parent=1 // pred_check_branch
      %11 = sbr.rel (0) target = $region5
    $region4: #{fine_tune_model_forward.1} parent=1 // pred_region
      _
    $region5: #{fine_tune_model_forward.1} parent=1 // pred_fallthru
      _
    // Predicated region
    $region6: #{fine_tune_model_forward.1} parent=1 // pred_check
      _
    $region7: #{fine_tune_model_forward.1} parent=1 // pred_check_branch
      %13 = sbr.rel (0) target = $region9
    $region8: #{fine_tune_model_forward.1} parent=1 // pred_region
      _
    $region9: #{fine_tune_model_forward.1} parent=1 // pred_fallthru
      _
    // Predicated region
    $region10: #{fine_tune_model_forward.1} parent=1 // pred_check
      _
    $region11: #{fine_tune_model_forward.1} parent=1 // pred_check_branch
      %15 = sbr.rel (0) target = $region13
    $region12: #{fine_tune_model_forward.1} parent=1 // pred_region
      _
    $region13: #{fine_tune_model_forward.1} parent=1 // pred_fallthru
      _
    // Predicated region
    $region14: #{fine_tune_model_forward.1} parent=1 // pred_check
      _
    $region15: #{fine_tune_model_forward.1} parent=1 // pred_check_branch
      %17 = sbr.rel (0) target = $region17
    $region16: #{fine_tune_model_forward.1} parent=1 // pred_region
      %19 = vsyncadd [#allocation4], 0
      %s20 = sshll.u32 %s3, 4
      %s21 = int_to_ptr.hbm [resolvable:$true] %s20
      %s22 = sshll.u32 [#allocation3], 4
      %s23 = int_to_ptr.vmem [resolvable:$true] %s22
      %28 = dma.hbm_to_vmem [thread:$0]  %s21, 4480, %s23, [#allocation4], 128, 128, 8
    $region17: #{fine_tune_model_forward.1} parent=1 // pred_fallthru
      _
    // Predicated region
    $region18: #{fine_tune_model_forward.1} parent=1 // pred_check
      _
    $region19: #{fine_tune_model_forward.1} parent=1 // pred_check_branch
      %30 = sbr.rel (0) target = $region21
    $region20: #{fine_tune_model_forward.1} parent=1 // pred_region
      %32 = dma.done [#allocation4], 4480
    $region21: #{fine_tune_model_forward.1} parent=1 // pred_fallthru
      _
    %v34 = vld [vmem:[%s0] sm:$0xff]
    %v35 = vld [vmem:[%s0 + $0x8] sm:$0xff]
    %v36 = vlaneseq
    %v37 = vand.u32 %v36, 127
    %38 = vset.pattern.permute.xlu0 0
    %39 = vperm.xlu0 %38, %v34
    %v40 = vpop.permute.xlu0 %39
    %41 = vset.pattern.permute.xlu0 0
    %42 = vperm.xlu0 %41, %v35
    %v43 = vpop.permute.xlu0 %42
    %vm44 = vcmp.eq.s32.totalorder %v40, %v37
    %vm45 = vcmp.eq.s32.totalorder %v43, %v37
    %v46 = vsel %vm44, 1, 0
    %v47 = vsel %vm45, 1, 0
    %v48 = vcvt.s32.f32 %v46
    %v49 = vcvt.s32.f32 %v47
    %50 = vset.pattern.permute.xlu0 2
    %51 = vperm.xlu0 %50, %v34
    %v52 = vpop.permute.xlu0 %51
    %53 = vset.pattern.permute.xlu0 2
    %54 = vperm.xlu0 %53, %v35
    %v55 = vpop.permute.xlu0 %54
    %vm56 = vcmp.eq.s32.totalorder %v52, %v37
    %vm57 = vcmp.eq.s32.totalorder %v55, %v37
    %v58 = vsel %vm56, 1, 0
    %v59 = vsel %vm57, 1, 0
    %v60 = vcvt.s32.f32 %v58
    %v61 = vcvt.s32.f32 %v59
    %v62 = vcvt.s32.f32 %v34
    %v63 = vcvt.s32.f32 %v35
    %v64 = vld [vmem:[#allocation3] sm:$0xff]
    %v65 = vld [vmem:[#allocation3 + $0x8] sm:$0xff]
    %v66 = vld [vmem:[#allocation3 + $0x10] sm:$0xff]
    %v67 = vld [vmem:[#allocation3 + $0x18] sm:$0xff]
    %v68 = vld [vmem:[#allocation3 + $0x20] sm:$0xff]
    %v69 = vld [vmem:[#allocation3 + $0x28] sm:$0xff]
    %v70 = vld [vmem:[#allocation3 + $0x30] sm:$0xff]
    %v71 = vld [vmem:[#allocation3 + $0x38] sm:$0xff]
    %v72 = vld [vmem:[#allocation3 + $0x40] sm:$0xff]
    %v73 = vld [vmem:[#allocation3 + $0x48] sm:$0xff]
    %v74 = vld [vmem:[#allocation3 + $0x50] sm:$0x3]
    %vm75 = vcmask 130048
    %v77 = vsel %vm75, %v60, 0
    %v80 = vsel %vm75, %v61, 0
    %82 = vmatpush.msra.mxu0 0.0
    %83 = vmatpush.msra.mxu0 0.0
    %84 = vmatpush.msra.mxu0 0.0
    %85 = vmatpush.msra.mxu0 0.0
    %86 = vmatpush.msra.mxu0 0.0
    %87 = vmatpush.msra.mxu0 0.0
    %88 = vmatpush.msra.mxu0 0.0
    %89 = vmatpush.msra.mxu0 0.0
    %90 = vmatpush.msra.mxu0 0.0
    %91 = vmatpush.msra.mxu0 0.0
    %92 = vmatpush.msra.mxu0 0.0
    %93 = vmatpush.msra.mxu0 0.0
    %94 = vmatpush.msra.mxu0 0.0
    %95 = vmatpush.msra.mxu0 0.0
    %96 = vmatpush.msra.mxu0 %v73
    %97 = vmatpush.msra.mxu0 %v72
    %98 = vmatmul.f32.gmra.mxu0 %v77
    %v99 = vpop.f32.mrf.mxu0
    %v100 = vadd.f32 0.0, %v99
    %101 = vmatmul.f32.gmra.mxu0 %v80
    %v102 = vpop.f32.mrf.mxu0
    %v103 = vadd.f32 0.0, %v102
    %104 = vdwg.mxu0
    %vm105 = vcmask 523264
    %v107 = vsel %vm105, %v48, 0
    %v110 = vsel %vm105, %v49, 0
    %112 = vmatpush.msra.mxu0 0.0
    %113 = vmatpush.msra.mxu0 0.0
    %114 = vmatpush.msra.mxu0 0.0
    %115 = vmatpush.msra.mxu0 0.0
    %116 = vmatpush.msra.mxu0 0.0
    %117 = vmatpush.msra.mxu0 0.0
    %118 = vmatpush.msra.mxu0 0.0
    %119 = vmatpush.msra.mxu0 0.0
    %120 = vmatpush.msra.mxu0 %v71
    %121 = vmatpush.msra.mxu0 %v70
    %122 = vmatpush.msra.mxu0 %v69
    %123 = vmatpush.msra.mxu0 %v68
    %124 = vmatpush.msra.mxu0 %v67
    %125 = vmatpush.msra.mxu0 %v66
    %126 = vmatpush.msra.mxu0 %v65
    %127 = vmatpush.msra.mxu0 %v64
    %128 = vmatmul.f32.gmra.mxu0 %v107
    %v129 = vpop.f32.mrf.mxu0
    %v130 = vadd.f32 %v100, %v129
    %131 = vmatmul.f32.gmra.mxu0 %v110
    %v132 = vpop.f32.mrf.mxu0
    %v133 = vadd.f32 %v103, %v132
    %134 = vdwg.mxu0
    %v135 = vsub.f32 1.0, %v62
    %v136 = vsub.f32 1.0, %v63
    %138 = vset.pattern.permute.xlu0 1
    %139 = vperm.xlu0 %138, %v135
    %v140 = vpop.permute.xlu0 %139
    %143 = vset.pattern.permute.xlu0 1
    %144 = vperm.xlu0 %143, %v136
    %v145 = vpop.permute.xlu0 %144
    %v147 = vperm.slane %v74, 0
    %v148 = vmul.f32 %v140, %v147
    %v149 = vmul.f32 %v145, %v147
    %v150 = vadd.f32 %v130, %v148
    %v151 = vadd.f32 %v133, %v149
    %153 = vset.pattern.permute.xlu0 1
    %154 = vperm.xlu0 %153, %v62
    %v155 = vpop.permute.xlu0 %154
    %158 = vset.pattern.permute.xlu0 1
    %159 = vperm.xlu0 %158, %v63
    %v160 = vpop.permute.xlu0 %159
    %v162 = vperm.slane %v74, 1
    %v163 = vmul.f32 %v155, %v162
    %v164 = vmul.f32 %v160, %v162
    %v165 = vadd.f32 %v150, %v163
    %v166 = vadd.f32 %v151, %v164
    %v167 = vld [vmem:[%s2] sm:$0x1]
    %v168 = vld [vmem:[%s2 + $0x1] sm:$0x1]
    %vm169 = vcmask 261120
    %v170 = vsel %vm169, %v165, 0.0
    %171 = vadd.xlane.f32.xlu0 %v170
    %v172 = vpop.xlane.xlu0 %171
    %v173 = vsel %vm169, %v166, 0.0
    %174 = vadd.xlane.f32.xlu0 %v173
    %v175 = vpop.xlane.xlu0 %174
    %v176 = vrcp.pop 32.0
    %v177 = vmul.f32 32.0, %v176
    %v178 = vsub.f32 1.0, %v177
    %v179 = vmul.f32 %v176, %v178
    %v180 = vadd.f32 %v176, %v179
    %vm181 = vweird.f32 %v176
    %v182 = vsel %vm181, %v176, %v180
    %v183 = vmul.f32 %v172, %v182
    %v184 = vmul.f32 %v175, %v182
    %v185 = vsub.f32 %v165, %v183
    %v186 = vsub.f32 %v166, %v184
    %v187 = vmul.f32 %v185, %v185
    %v188 = vmul.f32 %v186, %v186
    %v189 = vsel %vm169, %v187, 0.0
    %190 = vadd.xlane.f32.xlu0 %v189
    %v191 = vpop.xlane.xlu0 %190
    %v192 = vsel %vm169, %v188, 0.0
    %193 = vadd.xlane.f32.xlu0 %v192
    %v194 = vpop.xlane.xlu0 %193
    %v195 = vmul.f32 %v191, %v182
    %v196 = vmul.f32 %v194, %v182
    %v197 = vadd.f32 %v195, 1e-12
    %v198 = vadd.f32 %v196, 1e-12
    %v199 = vrsqrt.pop %v197
    %v200 = vmul.f32 %v199, %v197
    %v201 = vmul.f32 %v200, %v199
    %v202 = vmul.f32 0.5, %v201
    %v203 = vsub.f32 1.5, %v202
    %v204 = vmul.f32 %v199, %v203
    %vm205 = vweird.f32 %v197
    %vm206 = vweird.f32 %v199
    %vm207 = vmor %vm205, %vm206
    %v208 = vsel %vm207, %v199, %v204
    %v209 = vrsqrt.pop %v198
    %v210 = vmul.f32 %v209, %v198
    %v211 = vmul.f32 %v210, %v209
    %v212 = vmul.f32 0.5, %v211
    %v213 = vsub.f32 1.5, %v212
    %v214 = vmul.f32 %v209, %v213
    %vm215 = vweird.f32 %v198
    %vm216 = vweird.f32 %v209
    %vm217 = vmor %vm215, %vm216
    %v218 = vsel %vm217, %v209, %v214
    %v219 = vmul.f32 %v185, %v208
    %v220 = vmul.f32 %v186, %v218
    %v221 = vperm.slane %v167, 0
    %v222 = vmul.f32 %v219, %v221
    %v223 = vmul.f32 %v220, %v221
    %v224 = vperm.slane %v168, 0
    %v225 = vadd.f32 %v222, %v224
    %v226 = vadd.f32 %v223, %v224
    %v227 = vld [vmem:[#allocation3 + $0x58] sm:$0xff]
    %v228 = vld [vmem:[#allocation3 + $0x60] sm:$0xff]
    %v229 = vld [vmem:[#allocation3 + $0x68] sm:$0xff]
    %v230 = vld [vmem:[#allocation3 + $0x70] sm:$0xff]
    %v231 = vpack.c.bf16 %v226, %v225
    %v232 = vpack.c.bf16 %v228, %v227
    %v233 = vpack.c.bf16 %v230, %v229
    %v234 = vld [vmem:[%s2 + $0x6] sm:$0x1]
    %v235 = vperm.slane %v234, 0
    %v237 = vsel %vm169, %v231, 0
    %239 = vmatpush.bf16.msra.mxu0 0
    %240 = vmatpush.bf16.msra.mxu0 0
    %241 = vmatpush.bf16.msra.mxu0 0
    %242 = vmatpush.bf16.msra.mxu0 0
    %243 = vmatpush.bf16.msra.mxu0 0
    %244 = vmatpush.bf16.msra.mxu0 0
    %245 = vmatpush.bf16.msra.mxu0 %v233
    %246 = vmatpush.bf16.msra.mxu0 %v232
    %247 = vmatmul.bf16.gmra.mxu0 %v237
    %v248 = vpop.f32.mrf.mxu0
    %v249 = vadd.f32 %v235, %v248
    %v250 = vpop.f32.mrf.mxu0
    %v251 = vadd.f32 %v235, %v250
    %252 = vdwg.mxu0
    %v253 = vld [vmem:[%s1] sm:$0x3]
    %v254 = vsub.f32 1.0, %v253
    %v255 = vmul.f32 %v254, -10000.0
    %v257 = vrot.slane %v255, 1
    %259 = vrot.lane.b32.xlu0 %v249, 96
    %v260 = vpop.permute.xlu0 %259
    %v261 = vsel %vm75, %v249, 0
    %v263 = vsel %vm75, %v260, 0
    %265 = vmatpush.xpose.msra.mxu0 0.0
    %266 = vmatpush.xpose.msra.mxu0 0.0
    %267 = vmatpush.xpose.msra.mxu0 0.0
    %268 = vmatpush.xpose.msra.mxu0 0.0
    %269 = vmatpush.xpose.msra.mxu0 0.0
    %270 = vmatpush.xpose.msra.mxu0 0.0
    %271 = vmatpush.xpose.msra.mxu0 0.0
    %272 = vmatpush.xpose.msra.mxu0 0.0
    %273 = vmatpush.xpose.msra.mxu0 0.0
    %274 = vmatpush.xpose.msra.mxu0 0.0
    %275 = vmatpush.xpose.msra.mxu0 0.0
    %276 = vmatpush.xpose.msra.mxu0 0.0
    %277 = vmatpush.xpose.msra.mxu0 0.0
    %278 = vmatpush.xpose.msra.mxu0 0.0
    %279 = vmatpush.xpose.msra.mxu0 0.0
    %280 = vmatpush.xpose.msra.mxu0 %v263
    %281 = vmatmul.f32.gmra.mxu0 %v261
    %v282 = vpop.f32.mrf.mxu0
    %v283 = vadd.f32 0.0, %v282
    %284 = vdwg.mxu0
    %286 = vrot.lane.b32.xlu0 %v251, 96
    %v287 = vpop.permute.xlu0 %286
    %v288 = vsel %vm75, %v251, 0
    %v290 = vsel %vm75, %v287, 0
    %292 = vmatpush.xpose.msra.mxu0 0.0
    %293 = vmatpush.xpose.msra.mxu0 0.0
    %294 = vmatpush.xpose.msra.mxu0 0.0
    %295 = vmatpush.xpose.msra.mxu0 0.0
    %296 = vmatpush.xpose.msra.mxu0 0.0
    %297 = vmatpush.xpose.msra.mxu0 0.0
    %298 = vmatpush.xpose.msra.mxu0 0.0
    %299 = vmatpush.xpose.msra.mxu0 0.0
    %300 = vmatpush.xpose.msra.mxu0 0.0
    %301 = vmatpush.xpose.msra.mxu0 0.0
    %302 = vmatpush.xpose.msra.mxu0 0.0
    %303 = vmatpush.xpose.msra.mxu0 0.0
    %304 = vmatpush.xpose.msra.mxu0 0.0
    %305 = vmatpush.xpose.msra.mxu0 0.0
    %306 = vmatpush.xpose.msra.mxu0 0.0
    %307 = vmatpush.xpose.msra.mxu0 %v290
    %308 = vmatmul.f32.gmra.mxu0 %v288
    %v309 = vpop.f32.mrf.mxu0
    %v310 = vadd.f32 0.0, %v309
    %311 = vdwg.mxu0
    %v312 = vmul.f32 %v283, 0.25
    %v313 = vmul.f32 %v310, 0.25
    %v314 = vperm.slane %v255, 0
    %v315 = vperm.slane %v257, 0
    %v318 = vadd.f32 %v312, %v314
    %v319 = vadd.f32 %v313, %v315
    %vm320 = vcmask 64512
    %v321 = vsel %vm320, %v318, -inf
    %322 = vmax.xlane.f32.xlu0 %v321
    %v323 = vpop.xlane.xlu0 %322
    %v324 = vsel %vm320, %v319, -inf
    %325 = vmax.xlane.f32.xlu0 %v324
    %v326 = vpop.xlane.xlu0 %325
    %v327 = vsub.f32 %v318, %v323
    %v328 = vsub.f32 %v319, %v326
    %v329 = vmul.f32 %v327, 1.442695
    %v330 = vpow.pop %v329
    %v331 = vmul.f32 %v328, 1.442695
    %v332 = vpow.pop %v331
    %v333 = vsel %vm320, %v330, 0.0
    %334 = vadd.xlane.f32.xlu0 %v333
    %v335 = vpop.xlane.xlu0 %334
    %v336 = vsel %vm320, %v332, 0.0
    %337 = vadd.xlane.f32.xlu0 %v336
    %v338 = vpop.xlane.xlu0 %337
    %v339 = vrcp.pop %v335
    %v340 = vmul.f32 %v335, %v339
    %v341 = vsub.f32 1.0, %v340
    %v342 = vmul.f32 %v339, %v341
    %v343 = vadd.f32 %v339, %v342
    %vm344 = vweird.f32 %v335
    %vm345 = vweird.f32 %v339
    %vm346 = vmor %vm344, %vm345
    %v347 = vsel %vm346, %v339, %v343
    %v348 = vand.u32 2147483647, %v335
    %vm349 = vcmp.eq.f32.partialorder %v348, 8.507059e+37
    %v350 = vand.u32 %v335, 2147483648
    %v351 = vor.u32 1.1754944e-38, %v350
    %v352 = vsel %vm349, %v351, %v347
    %v353 = vmul.f32 %v330, %v352
    %v354 = vrcp.pop %v338
    %v355 = vmul.f32 %v338, %v354
    %v356 = vsub.f32 1.0, %v355
    %v357 = vmul.f32 %v354, %v356
    %v358 = vadd.f32 %v354, %v357
    %vm359 = vweird.f32 %v338
    %vm360 = vweird.f32 %v354
    %vm361 = vmor %vm359, %vm360
    %v362 = vsel %vm361, %v354, %v358
    %v363 = vand.u32 2147483647, %v338
    %vm364 = vcmp.eq.f32.partialorder %v363, 8.507059e+37
    %v365 = vand.u32 %v338, 2147483648
    %v366 = vor.u32 1.1754944e-38, %v365
    %v367 = vsel %vm364, %v366, %v362
    %v368 = vmul.f32 %v332, %v367
    %369 = vrot.lane.b32.xlu0 %v249, 64
    %v370 = vpop.permute.xlu0 %369
    %v373 = vsel %vm320, %v353, 0
    %375 = vmatpush.msra.mxu0 0.0
    %376 = vmatpush.msra.mxu0 0.0
    %377 = vmatpush.msra.mxu0 0.0
    %378 = vmatpush.msra.mxu0 0.0
    %379 = vmatpush.msra.mxu0 0.0
    %380 = vmatpush.msra.mxu0 0.0
    %381 = vmatpush.msra.mxu0 0.0
    %382 = vmatpush.msra.mxu0 0.0
    %383 = vmatpush.msra.mxu0 0.0
    %384 = vmatpush.msra.mxu0 0.0
    %385 = vmatpush.msra.mxu0 0.0
    %386 = vmatpush.msra.mxu0 0.0
    %387 = vmatpush.msra.mxu0 0.0
    %388 = vmatpush.msra.mxu0 0.0
    %389 = vmatpush.msra.mxu0 0.0
    %390 = vmatpush.msra.mxu0 %v370
    %391 = vmatmul.f32.gmra.mxu0 %v373
    %v392 = vpop.f32.mrf.mxu0
    %v393 = vadd.f32 0.0, %v392
    %394 = vdwg.mxu0
    %395 = vrot.lane.b32.xlu0 %v251, 64
    %v396 = vpop.permute.xlu0 %395
    %v399 = vsel %vm320, %v368, 0
    %401 = vmatpush.msra.mxu0 0.0
    %402 = vmatpush.msra.mxu0 0.0
    %403 = vmatpush.msra.mxu0 0.0
    %404 = vmatpush.msra.mxu0 0.0
    %405 = vmatpush.msra.mxu0 0.0
    %406 = vmatpush.msra.mxu0 0.0
    %407 = vmatpush.msra.mxu0 0.0
    %408 = vmatpush.msra.mxu0 0.0
    %409 = vmatpush.msra.mxu0 0.0
    %410 = vmatpush.msra.mxu0 0.0
    %411 = vmatpush.msra.mxu0 0.0
    %412 = vmatpush.msra.mxu0 0.0
    %413 = vmatpush.msra.mxu0 0.0
    %414 = vmatpush.msra.mxu0 0.0
    %415 = vmatpush.msra.mxu0 0.0
    %416 = vmatpush.msra.mxu0 %v396
    %417 = vmatmul.f32.gmra.mxu0 %v399
    %v418 = vpop.f32.mrf.mxu0
    %v419 = vadd.f32 0.0, %v418
    %420 = vdwg.mxu0
    %421 = vst.msk [vmem:[#allocation2] sm:$0xff] %vm75, %v393
    %422 = vst.msk [vmem:[#allocation2 + $0x8] sm:$0xff] %vm75, %v419
    %423 = vrot.lane.b32.xlu0 %v249, 112
    %v424 = vpop.permute.xlu0 %423
    %425 = vrot.lane.b32.xlu0 %v249, 80
    %v426 = vpop.permute.xlu0 %425
    %v427 = vsel %vm75, %v424, 0
    %v429 = vsel %vm75, %v426, 0
    %431 = vmatpush.xpose.msra.mxu0 0.0
    %432 = vmatpush.xpose.msra.mxu0 0.0
    %433 = vmatpush.xpose.msra.mxu0 0.0
    %434 = vmatpush.xpose.msra.mxu0 0.0
    %435 = vmatpush.xpose.msra.mxu0 0.0
    %436 = vmatpush.xpose.msra.mxu0 0.0
    %437 = vmatpush.xpose.msra.mxu0 0.0
    %438 = vmatpush.xpose.msra.mxu0 0.0
    %439 = vmatpush.xpose.msra.mxu0 0.0
    %440 = vmatpush.xpose.msra.mxu0 0.0
    %441 = vmatpush.xpose.msra.mxu0 0.0
    %442 = vmatpush.xpose.msra.mxu0 0.0
    %443 = vmatpush.xpose.msra.mxu0 0.0
    %444 = vmatpush.xpose.msra.mxu0 0.0
    %445 = vmatpush.xpose.msra.mxu0 0.0
    %446 = vmatpush.xpose.msra.mxu0 %v429
    %447 = vmatmul.f32.gmra.mxu0 %v427
    %v448 = vpop.f32.mrf.mxu0
    %v449 = vadd.f32 0.0, %v448
    %450 = vdwg.mxu0
    %451 = vrot.lane.b32.xlu0 %v251, 112
    %v452 = vpop.permute.xlu0 %451
    %453 = vrot.lane.b32.xlu0 %v251, 80
    %v454 = vpop.permute.xlu0 %453
    %v455 = vsel %vm75, %v452, 0
    %v457 = vsel %vm75, %v454, 0
    %459 = vmatpush.xpose.msra.mxu0 0.0
    %460 = vmatpush.xpose.msra.mxu0 0.0
    %461 = vmatpush.xpose.msra.mxu0 0.0
    %462 = vmatpush.xpose.msra.mxu0 0.0
    %463 = vmatpush.xpose.msra.mxu0 0.0
    %464 = vmatpush.xpose.msra.mxu0 0.0
    %465 = vmatpush.xpose.msra.mxu0 0.0
    %466 = vmatpush.xpose.msra.mxu0 0.0
    %467 = vmatpush.xpose.msra.mxu0 0.0
    %468 = vmatpush.xpose.msra.mxu0 0.0
    %469 = vmatpush.xpose.msra.mxu0 0.0
    %470 = vmatpush.xpose.msra.mxu0 0.0
    %471 = vmatpush.xpose.msra.mxu0 0.0
    %472 = vmatpush.xpose.msra.mxu0 0.0
    %473 = vmatpush.xpose.msra.mxu0 0.0
    %474 = vmatpush.xpose.msra.mxu0 %v457
    %475 = vmatmul.f32.gmra.mxu0 %v455
    %v476 = vpop.f32.mrf.mxu0
    %v477 = vadd.f32 0.0, %v476
    %478 = vdwg.mxu0
    %v479 = vmul.f32 %v449, 0.25
    %v480 = vmul.f32 %v477, 0.25
    %v481 = vadd.f32 %v479, %v314
    %v482 = vadd.f32 %v480, %v315
    %v483 = vsel %vm320, %v481, -inf
    %484 = vmax.xlane.f32.xlu0 %v483
    %v485 = vpop.xlane.xlu0 %484
    %v486 = vsel %vm320, %v482, -inf
    %487 = vmax.xlane.f32.xlu0 %v486
    %v488 = vpop.xlane.xlu0 %487
    %v489 = vsub.f32 %v481, %v485
    %v490 = vsub.f32 %v482, %v488
    %v491 = vmul.f32 %v489, 1.442695
    %v492 = vpow.pop %v491
    %v493 = vmul.f32 %v490, 1.442695
    %v494 = vpow.pop %v493
    %v495 = vsel %vm320, %v492, 0.0
    %496 = vadd.xlane.f32.xlu0 %v495
    %v497 = vpop.xlane.xlu0 %496
    %v498 = vsel %vm320, %v494, 0.0
    %499 = vadd.xlane.f32.xlu0 %v498
    %v500 = vpop.xlane.xlu0 %499
    %v501 = vrcp.pop %v497
    %v502 = vmul.f32 %v497, %v501
    %v503 = vsub.f32 1.0, %v502
    %v504 = vmul.f32 %v501, %v503
    %v505 = vadd.f32 %v501, %v504
    %vm506 = vweird.f32 %v497
    %vm507 = vweird.f32 %v501
    %vm508 = vmor %vm506, %vm507
    %v509 = vsel %vm508, %v501, %v505
    %v510 = vand.u32 2147483647, %v497
    %vm511 = vcmp.eq.f32.partialorder %v510, 8.507059e+37
    %v512 = vand.u32 %v497, 2147483648
    %v513 = vor.u32 1.1754944e-38, %v512
    %v514 = vsel %vm511, %v513, %v509
    %v515 = vmul.f32 %v492, %v514
    %v516 = vrcp.pop %v500
    %v517 = vmul.f32 %v500, %v516
    %v518 = vsub.f32 1.0, %v517
    %v519 = vmul.f32 %v516, %v518
    %v520 = vadd.f32 %v516, %v519
    %vm521 = vweird.f32 %v500
    %vm522 = vweird.f32 %v516
    %vm523 = vmor %vm521, %vm522
    %v524 = vsel %vm523, %v516, %v520
    %v525 = vand.u32 2147483647, %v500
    %vm526 = vcmp.eq.f32.partialorder %v525, 8.507059e+37
    %v527 = vand.u32 %v500, 2147483648
    %v528 = vor.u32 1.1754944e-38, %v527
    %v529 = vsel %vm526, %v528, %v524
    %v530 = vmul.f32 %v494, %v529
    %531 = vrot.lane.b32.xlu0 %v249, 48
    %v532 = vpop.permute.xlu0 %531
    %v535 = vsel %vm320, %v515, 0
    %537 = vmatpush.msra.mxu0 0.0
    %538 = vmatpush.msra.mxu0 0.0
    %539 = vmatpush.msra.mxu0 0.0
    %540 = vmatpush.msra.mxu0 0.0
    %541 = vmatpush.msra.mxu0 0.0
    %542 = vmatpush.msra.mxu0 0.0
    %543 = vmatpush.msra.mxu0 0.0
    %544 = vmatpush.msra.mxu0 0.0
    %545 = vmatpush.msra.mxu0 0.0
    %546 = vmatpush.msra.mxu0 0.0
    %547 = vmatpush.msra.mxu0 0.0
    %548 = vmatpush.msra.mxu0 0.0
    %549 = vmatpush.msra.mxu0 0.0
    %550 = vmatpush.msra.mxu0 0.0
    %551 = vmatpush.msra.mxu0 0.0
    %552 = vmatpush.msra.mxu0 %v532
    %553 = vmatmul.f32.gmra.mxu0 %v535
    %v554 = vpop.f32.mrf.mxu0
    %v555 = vadd.f32 0.0, %v554
    %556 = vdwg.mxu0
    %557 = vrot.lane.b32.xlu0 %v251, 48
    %v558 = vpop.permute.xlu0 %557
    %v561 = vsel %vm320, %v530, 0
    %563 = vmatpush.msra.mxu0 0.0
    %564 = vmatpush.msra.mxu0 0.0
    %565 = vmatpush.msra.mxu0 0.0
    %566 = vmatpush.msra.mxu0 0.0
    %567 = vmatpush.msra.mxu0 0.0
    %568 = vmatpush.msra.mxu0 0.0
    %569 = vmatpush.msra.mxu0 0.0
    %570 = vmatpush.msra.mxu0 0.0
    %571 = vmatpush.msra.mxu0 0.0
    %572 = vmatpush.msra.mxu0 0.0
    %573 = vmatpush.msra.mxu0 0.0
    %574 = vmatpush.msra.mxu0 0.0
    %575 = vmatpush.msra.mxu0 0.0
    %576 = vmatpush.msra.mxu0 0.0
    %577 = vmatpush.msra.mxu0 0.0
    %578 = vmatpush.msra.mxu0 %v558
    %579 = vmatmul.f32.gmra.mxu0 %v561
    %v580 = vpop.f32.mrf.mxu0
    %v581 = vadd.f32 0.0, %v580
    %582 = vdwg.mxu0
    %585 = vrot.lane.b32.xlu0 %v555, 16
    %v586 = vpop.permute.xlu0 %585
    %587 = vrot.lane.b32.xlu0 %v581, 16
    %v588 = vpop.permute.xlu0 %587
    %vm591 = vcmask 261248
    %592 = vst.msk [vmem:[#allocation2] sm:$0xff] %vm591, %v586
    %593 = vst.msk [vmem:[#allocation2 + $0x8] sm:$0xff] %vm591, %v588
    %v594 = vld [vmem:[#allocation2] sm:$0xff]
    %v595 = vld [vmem:[#allocation2 + $0x8] sm:$0xff]
    %v596 = vld [vmem:[#allocation3 + $0x78] sm:$0xff]
    %v597 = vld [vmem:[#allocation3 + $0x80] sm:$0xff]
    %v598 = vld [vmem:[#allocation3 + $0x88] sm:$0xff]
    %v599 = vld [vmem:[#allocation3 + $0x90] sm:$0xff]
    %v600 = vpack.c.bf16 %v595, %v594
    %v601 = vpack.c.bf16 %v597, %v596
    %v602 = vpack.c.bf16 %v599, %v598
    %v603 = vld [vmem:[%s2 + $0x7] sm:$0x1]
    %v604 = vperm.slane %v603, 0
    %v606 = vsel %vm169, %v600, 0
    %608 = vmatpush.bf16.msra.mxu0 0
    %609 = vmatpush.bf16.msra.mxu0 0
    %610 = vmatpush.bf16.msra.mxu0 0
    %611 = vmatpush.bf16.msra.mxu0 0
    %612 = vmatpush.bf16.msra.mxu0 0
    %613 = vmatpush.bf16.msra.mxu0 0
    %614 = vmatpush.bf16.msra.mxu0 %v602
    %615 = vmatpush.bf16.msra.mxu0 %v601
    %616 = vmatmul.bf16.gmra.mxu0 %v606
    %v617 = vpop.f32.mrf.mxu0
    %v618 = vadd.f32 %v604, %v617
    %v619 = vpop.f32.mrf.mxu0
    %v620 = vadd.f32 %v604, %v619
    %621 = vdwg.mxu0
    %v622 = vadd.f32 %v225, %v618
    %v623 = vadd.f32 %v226, %v620
    %v624 = vld [vmem:[%s2 + $0x2] sm:$0x1]
    %v625 = vld [vmem:[%s2 + $0x3] sm:$0x1]
    %v626 = vsel %vm169, %v622, 0.0
    %627 = vadd.xlane.f32.xlu0 %v626
    %v628 = vpop.xlane.xlu0 %627
    %v629 = vsel %vm169, %v623, 0.0
    %630 = vadd.xlane.f32.xlu0 %v629
    %v631 = vpop.xlane.xlu0 %630
    %v632 = vmul.f32 %v628, %v182
    %v633 = vmul.f32 %v631, %v182
    %v634 = vsub.f32 %v622, %v632
    %v635 = vsub.f32 %v623, %v633
    %v636 = vmul.f32 %v634, %v634
    %v637 = vmul.f32 %v635, %v635
    %v638 = vsel %vm169, %v636, 0.0
    %639 = vadd.xlane.f32.xlu0 %v638
    %v640 = vpop.xlane.xlu0 %639
    %v641 = vsel %vm169, %v637, 0.0
    %642 = vadd.xlane.f32.xlu0 %v641
    %v643 = vpop.xlane.xlu0 %642
    %v644 = vmul.f32 %v640, %v182
    %v645 = vmul.f32 %v643, %v182
    %v646 = vadd.f32 %v644, 1e-12
    %v647 = vadd.f32 %v645, 1e-12
    %v648 = vrsqrt.pop %v646
    %v649 = vmul.f32 %v648, %v646
    %v650 = vmul.f32 %v649, %v648
    %v651 = vmul.f32 0.5, %v650
    %v652 = vsub.f32 1.5, %v651
    %v653 = vmul.f32 %v648, %v652
    %vm654 = vweird.f32 %v646
    %vm655 = vweird.f32 %v648
    %vm656 = vmor %vm654, %vm655
    %v657 = vsel %vm656, %v648, %v653
    %v658 = vrsqrt.pop %v647
    %v659 = vmul.f32 %v658, %v647
    %v660 = vmul.f32 %v659, %v658
    %v661 = vmul.f32 0.5, %v660
    %v662 = vsub.f32 1.5, %v661
    %v663 = vmul.f32 %v658, %v662
    %vm664 = vweird.f32 %v647
    %vm665 = vweird.f32 %v658
    %vm666 = vmor %vm664, %vm665
    %v667 = vsel %vm666, %v658, %v663
    %v668 = vmul.f32 %v634, %v657
    %v669 = vmul.f32 %v635, %v667
    %v670 = vperm.slane %v624, 0
    %v671 = vmul.f32 %v668, %v670
    %v672 = vmul.f32 %v669, %v670
    %v673 = vperm.slane %v625, 0
    %v674 = vadd.f32 %v671, %v673
    %v675 = vadd.f32 %v672, %v673
    %v676 = vld [vmem:[#allocation3 + $0x98] sm:$0xff]
    %v677 = vld [vmem:[#allocation3 + $0xa0] sm:$0xff]
    %v678 = vld [vmem:[#allocation3 + $0xa8] sm:$0xff]
    %v679 = vld [vmem:[#allocation3 + $0xb0] sm:$0xff]
    %v680 = vpack.c.bf16 %v675, %v674
    %v681 = vpack.c.bf16 %v677, %v676
    %v682 = vpack.c.bf16 %v679, %v678
    %v683 = vld [vmem:[%s2 + $0x8] sm:$0x1]
    %v684 = vperm.slane %v683, 0
    %v686 = vsel %vm169, %v680, 0
    %688 = vmatpush.bf16.msra.mxu0 0
    %689 = vmatpush.bf16.msra.mxu0 0
    %690 = vmatpush.bf16.msra.mxu0 0
    %691 = vmatpush.bf16.msra.mxu0 0
    %692 = vmatpush.bf16.msra.mxu0 0
    %693 = vmatpush.bf16.msra.mxu0 0
    %694 = vmatpush.bf16.msra.mxu0 %v682
    %695 = vmatpush.bf16.msra.mxu0 %v681
    %696 = vmatmul.bf16.gmra.mxu0 %v686
    %v697 = vpop.f32.mrf.mxu0
    %v698 = vadd.f32 %v684, %v697
    %v699 = vpop.f32.mrf.mxu0
    %v700 = vadd.f32 %v684, %v699
    %701 = vdwg.mxu0
    %v702 = vmul.f32 %v698, 0.5
    %v703 = vmul.f32 %v700, 0.5
    %v704 = vmul.f32 %v698, 0.044715
    %v705 = vmul.f32 %v700, 0.044715
    %v706 = vmul.f32 %v704, %v698
    %v707 = vmul.f32 %v705, %v700
    %v708 = vmul.f32 %v706, %v698
    %v709 = vmul.f32 %v707, %v700
    %v710 = vadd.f32 %v698, %v708
    %v711 = vadd.f32 %v700, %v709
    %v712 = vmul.f32 %v710, 0.7978846
    %v713 = vmul.f32 %v711, 0.7978846
    %v714 = vtanh.pop %v712
    %v715 = vtanh.pop %v713
    %v716 = vadd.f32 %v714, 1.0
    %v717 = vadd.f32 %v715, 1.0
    %v718 = vmul.f32 %v702, %v716
    %v719 = vmul.f32 %v703, %v717
    %v720 = vld [vmem:[#allocation3 + $0xb8] sm:$0xff]
    %v721 = vld [vmem:[#allocation3 + $0xc0] sm:$0xff]
    %v722 = vld [vmem:[#allocation3 + $0xc8] sm:$0xff]
    %v723 = vld [vmem:[#allocation3 + $0xd0] sm:$0xff]
    %v724 = vld [vmem:[#allocation3 + $0xd8] sm:$0xff]
    %v725 = vld [vmem:[#allocation3 + $0xe0] sm:$0xff]
    %v726 = vld [vmem:[#allocation3 + $0xe8] sm:$0xff]
    %v727 = vld [vmem:[#allocation3 + $0xf0] sm:$0xff]
    %v728 = vpack.c.bf16 %v719, %v718
    %v729 = vpack.c.bf16 %v721, %v720
    %v730 = vpack.c.bf16 %v723, %v722
    %v731 = vpack.c.bf16 %v725, %v724
    %v732 = vpack.c.bf16 %v727, %v726
    %v733 = vld [vmem:[%s2 + $0x9] sm:$0x1]
    %v734 = vperm.slane %v733, 0
    %v736 = vsel %vm105, %v728, 0
    %738 = vmatpush.bf16.msra.mxu0 0
    %739 = vmatpush.bf16.msra.mxu0 0
    %740 = vmatpush.bf16.msra.mxu0 0
    %741 = vmatpush.bf16.msra.mxu0 0
    %742 = vmatpush.bf16.msra.mxu0 %v732
    %743 = vmatpush.bf16.msra.mxu0 %v731
    %744 = vmatpush.bf16.msra.mxu0 %v730
    %745 = vmatpush.bf16.msra.mxu0 %v729
    %746 = vmatmul.bf16.gmra.mxu0 %v736
    %v747 = vpop.f32.mrf.mxu0
    %v748 = vadd.f32 %v734, %v747
    %v749 = vpop.f32.mrf.mxu0
    %v750 = vadd.f32 %v734, %v749
    %751 = vdwg.mxu0
    %v752 = vadd.f32 %v674, %v748
    %v753 = vadd.f32 %v675, %v750
    %v754 = vld [vmem:[%s2 + $0x4] sm:$0x1]
    %v755 = vld [vmem:[%s2 + $0x5] sm:$0x1]
    %v756 = vsel %vm169, %v752, 0.0
    %757 = vadd.xlane.f32.xlu0 %v756
    %v758 = vpop.xlane.xlu0 %757
    %v759 = vsel %vm169, %v753, 0.0
    %760 = vadd.xlane.f32.xlu0 %v759
    %v761 = vpop.xlane.xlu0 %760
    %v762 = vmul.f32 %v758, %v182
    %v763 = vmul.f32 %v761, %v182
    %v764 = vsub.f32 %v752, %v762
    %v765 = vsub.f32 %v753, %v763
    %v766 = vmul.f32 %v764, %v764
    %v767 = vmul.f32 %v765, %v765
    %v768 = vsel %vm169, %v766, 0.0
    %769 = vadd.xlane.f32.xlu0 %v768
    %v770 = vpop.xlane.xlu0 %769
    %v771 = vsel %vm169, %v767, 0.0
    %772 = vadd.xlane.f32.xlu0 %v771
    %v773 = vpop.xlane.xlu0 %772
    %v774 = vmul.f32 %v770, %v182
    %v775 = vmul.f32 %v773, %v182
    %v776 = vadd.f32 %v774, 1e-12
    %v777 = vadd.f32 %v775, 1e-12
    %v778 = vrsqrt.pop %v776
    %v779 = vmul.f32 %v778, %v776
    %v780 = vmul.f32 %v779, %v778
    %v781 = vmul.f32 0.5, %v780
    %v782 = vsub.f32 1.5, %v781
    %v783 = vmul.f32 %v778, %v782
    %vm784 = vweird.f32 %v776
    %vm785 = vweird.f32 %v778
    %vm786 = vmor %vm784, %vm785
    %v787 = vsel %vm786, %v778, %v783
    %v788 = vrsqrt.pop %v777
    %v789 = vmul.f32 %v788, %v777
    %v790 = vmul.f32 %v789, %v788
    %v791 = vmul.f32 0.5, %v790
    %v792 = vsub.f32 1.5, %v791
    %v793 = vmul.f32 %v788, %v792
    %vm794 = vweird.f32 %v777
    %vm795 = vweird.f32 %v788
    %vm796 = vmor %vm794, %vm795
    %v797 = vsel %vm796, %v788, %v793
    %v798 = vmul.f32 %v764, %v787
    %v799 = vmul.f32 %v765, %v797
    %v800 = vperm.slane %v754, 0
    %v801 = vmul.f32 %v798, %v800
    %v802 = vmul.f32 %v799, %v800
    %v803 = vperm.slane %v755, 0
    %v804 = vadd.f32 %v801, %v803
    %v805 = vadd.f32 %v802, %v803
    %v806 = vlaneseq
    %v807 = vshrl.u32 %v806, 7
    %v808 = vmul.u32 %v807, 8
    %vm809 = vcmp.eq.s32.totalorder %v37, %v808
    %v810 = vsel %vm809, 1, 0
    %v811 = vcvt.s32.f32 %v810
    %v813 = vsel %vm75, %v811, 0
    %815 = vmatpush.msra.mxu0 0.0
    %816 = vmatpush.msra.mxu0 0.0
    %817 = vmatpush.msra.mxu0 0.0
    %818 = vmatpush.msra.mxu0 0.0
    %819 = vmatpush.msra.mxu0 0.0
    %820 = vmatpush.msra.mxu0 0.0
    %821 = vmatpush.msra.mxu0 0.0
    %822 = vmatpush.msra.mxu0 0.0
    %823 = vmatpush.msra.mxu0 0.0
    %824 = vmatpush.msra.mxu0 0.0
    %825 = vmatpush.msra.mxu0 0.0
    %826 = vmatpush.msra.mxu0 0.0
    %827 = vmatpush.msra.mxu0 0.0
    %828 = vmatpush.msra.mxu0 0.0
    %829 = vmatpush.msra.mxu0 %v805
    %830 = vmatpush.msra.mxu0 %v804
    %831 = vmatmul.f32.gmra.mxu0 %v813
    %v832 = vpop.f32.mrf.mxu0
    %v833 = vadd.f32 0.0, %v832
    %834 = vdwg.mxu0
    %v835 = vld [vmem:[#allocation3 + $0xf8] sm:$0xff]
    %v836 = vld [vmem:[#allocation3 + $0x100] sm:$0xff]
    %v837 = vld [vmem:[#allocation3 + $0x108] sm:$0xff]
    %v838 = vld [vmem:[#allocation3 + $0x110] sm:$0xff]
    %v839 = vpack.c.bf16 %v833, %v833
    %v840 = vpack.c.bf16 %v836, %v835
    %v841 = vpack.c.bf16 %v838, %v837
    %v842 = vld [vmem:[%s2 + $0xa] sm:$0x1]
    %v843 = vperm.slane %v842, 0
    %v845 = vsel %vm169, %v839, 0
    %847 = vmatpush.bf16.msra.mxu0 0
    %848 = vmatpush.bf16.msra.mxu0 0
    %849 = vmatpush.bf16.msra.mxu0 0
    %850 = vmatpush.bf16.msra.mxu0 0
    %851 = vmatpush.bf16.msra.mxu0 0
    %852 = vmatpush.bf16.msra.mxu0 0
    %853 = vmatpush.bf16.msra.mxu0 %v841
    %854 = vmatpush.bf16.msra.mxu0 %v840
    %855 = vmatmul.bf16.gmra.mxu0 %v845
    %v856 = vpop.f32.mrf.mxu0
    %v857 = vadd.f32 %v843, %v856
    %v858 = vpop.f32.mrf.mxu0
    %859 = vdwg.mxu0
    %v860 = vtanh.pop %v857
    %v861 = vld [vmem:[%s2 + $0xb] sm:$0x1]
    %v862 = vperm.slane %v861, 0
    %v863 = vmul.f32 %v860, %v862
    %vm864 = vcmask 254976
    %v865 = vsel %vm864, %v863, 0.0
    %866 = vadd.xlane.f32.xlu0 %v865
    %v867 = vpop.xlane.xlu0 %866
    %v868 = vld [vmem:[%s2 + $0xc] sm:$0x1]
    %v869 = vperm.slane %v868, 0
    %v870 = vadd.f32 %v867, %v869
    %vm871 = vcmask 1024
    %872 = vst.msk [vmem:[%s4] sm:$0x3] %vm871, %v870
    // Predicated region
    $region22: #{fine_tune_model_forward.1} parent=1 // pred_check
      _
    $region23: #{fine_tune_model_forward.1} parent=1 // pred_check_branch
      %874 = sbr.rel (0) target = $region25
    $region24: #{fine_tune_model_forward.1} parent=1 // pred_region
      _
    $region25: #{fine_tune_model_forward.1} parent=1 // pred_fallthru
      _
    // Predicated region
    $region26: #{fine_tune_model_forward.1} parent=1 // pred_check
      _
    $region27: #{fine_tune_model_forward.1} parent=1 // pred_check_branch
      %876 = sbr.rel (0) target = $region29
    $region28: #{fine_tune_model_forward.1} parent=1 // pred_region
      _
    $region29: #{fine_tune_model_forward.1} parent=1 // pred_fallthru
      _
    %877 = vsyncpa [#allocation4], 1

</llo_original>
